<compile_context>
chip_gen: v7x
topology: tpu7x:2x2x1
jax: 0.10.0
libtpu: 0.0.40
codegen_flags: <defaults>
</compile_context>

<pallas_src>
import math

import jax
import jax.numpy as jnp
from jax.experimental import pallas as pl
from jax.experimental.pallas import tpu as pltpu

LANE = 128
MAX_TN = 2048                          # class-tile upper bound (sweepable)
WEIGHT_VMEM_BUDGET = 8 * 1024 * 1024   # double-buffered bf16 weight tile budget
                                       # (fits v5e 16 MiB default scoped VMEM)


def _round_up(n, m):
    return ((n + m - 1) // m) * m


# ------------------------------ Pallas kernel --------------------------------

def _fused_linear_kernel(x_ref, w_ref, b_ref, o_ref):
    # x_ref: (B, D) bf16 (resident across class tiles)
    # w_ref: (D, tn) bf16 (streamed), b_ref: (1, tn) f32, o_ref: (B, tn) f32
    o_ref[...] = jnp.dot(x_ref[...], w_ref[...],
                         preferred_element_type=jnp.float32) + b_ref[...]


def fused_linear(x, w_slab, b_slab, *, tn):
    """x @ w_slab + b_slab; w_slab is pre-transposed, lane-padded (D, Cp), Cp % tn == 0."""
    B, D = x.shape
    Dw, Cp = w_slab.shape
    assert D == Dw and Cp % tn == 0
    grid = (Cp // tn,)
    bytes_accessed = (x.size * x.dtype.itemsize
                      + w_slab.size * w_slab.dtype.itemsize
                      + b_slab.size * b_slab.dtype.itemsize
                      + B * Cp * 4)
    return pl.pallas_call(
        _fused_linear_kernel,
        out_shape=jax.ShapeDtypeStruct((B, Cp), jnp.float32),
        grid_spec=pltpu.PrefetchScalarGridSpec(
            num_scalar_prefetch=0,
            grid=grid,
            in_specs=[
                pl.BlockSpec((B, D), lambda j: (0, 0)),    # x resident across tiles
                pl.BlockSpec((D, tn), lambda j: (0, j)),   # weight column tile
                pl.BlockSpec((1, tn), lambda j: (0, j)),   # bias column tile
            ],
            out_specs=pl.BlockSpec((B, tn), lambda j: (0, j)),
        ),
        compiler_params=pltpu.CompilerParams(
            dimension_semantics=("parallel",)),
        cost_estimate=pl.CostEstimate(
            flops=2 * B * D * Cp, transcendentals=0,
            bytes_accessed=bytes_accessed),
    )(x, w_slab, b_slab)


# --------------------------- slab / tiling helpers ----------------------------

def _choose_tn(cp0, d):
    """Pick the class-tile width.

    Weight streaming is HBM-bound; per-grid-step overhead dominates small
    tiles, so use the largest tile whose double-buffered bf16 weight slab
    stays within the VMEM budget. Heads large enough to care are split into
    >= 2 grid steps so "parallel" can shard across v7x's 2 TensorCores.
    """
    tn_vmem = WEIGHT_VMEM_BUDGET // (2 * d * 2)        # 2 bufs x d x tn x 2 B
    tn = max(LANE, min(MAX_TN, (tn_vmem // LANE) * LANE))
    if cp0 > tn:
        return tn                                      # big head: many large steps
    if cp0 >= 1024:
        return _round_up(-(-cp0 // 2), LANE)           # split into 2 steps (v7x)
    return cp0                                         # tiny head: one step


def _make_head_slab(weights, biases):
    """Pre-transpose + per-head lane-align + pad heads into one MXU slab.

    weights: list of (C_i, D) f32 (PyTorch layout); biases: list of (C_i,).
    Each head starts at its own 128-lane boundary so the wrapper-side slices
    are lane-aligned. Returns (w_slab bf16 (D, Cp), b_slab f32 (1, Cp),
    per-head (offset, length) tuple, tn).
    """
    d = weights[0].shape[1]
    offsets, col = [], 0
    for w in weights:
        c = int(w.shape[0])
        offsets.append((col, c))
        col += _round_up(c, LANE)
    tn = _choose_tn(col, d)
    cp = _round_up(col, tn)
    w_slab = jnp.zeros((d, cp), jnp.bfloat16)
    b_slab = jnp.zeros((1, cp), jnp.float32)
    for (off, c), w, b in zip(offsets, weights, biases):
        w_slab = w_slab.at[:, off:off + c].set(w.T.astype(jnp.bfloat16))
        b_slab = b_slab.at[:, off:off + c].set(b.astype(jnp.float32))
    return w_slab, b_slab, tuple(offsets), tn


def _apply_head(x, w_slab, b_slab, tn, slices):
    # Cast x to bf16 ONCE (outside the class-tile grid); slices fuse under jit.
    out = fused_linear(x.astype(jnp.bfloat16), w_slab, b_slab, tn=tn)
    return tuple(out[:, off:off + c] for (off, c) in slices)


_apply_head_jit = jax.jit(_apply_head, static_argnums=(3, 4))


# --------------------------------- module ------------------------------------

def xavier_uniform(key, shape, gain):
    # PyTorch nn.init.xavier_uniform_ for Linear weight (fan_out, fan_in)
    fan_out, fan_in = shape
    bound = gain * math.sqrt(6.0 / (fan_in + fan_out))
    return jax.random.uniform(key, shape, jnp.float32, minval=-bound, maxval=bound)


class MutiClassifierPallas:
    def __init__(self, key, num_classes, feature_dim=512):
        self.num_classes = num_classes
        self.feature_dim = feature_dim
        k1, k2 = jax.random.split(key)
        # PyTorch-layout parameters (f32 reference copies).
        self.w_cls = xavier_uniform(k1, (num_classes, feature_dim), gain=0.1)
        self.b_cls = jnp.zeros((num_classes,), jnp.float32)
        self.w_bcls = xavier_uniform(k2, (num_classes * 2, feature_dim), gain=0.1)
        self.b_bcls = jnp.zeros((num_classes * 2,), jnp.float32)
        # Kernel-side slabs: transpose + per-head lane-align + bf16 cast, done ONCE.
        self._cls = _make_head_slab([self.w_cls], [self.b_cls])
        self._bcls = _make_head_slab([self.w_bcls], [self.b_bcls])
        self._fused = _make_head_slab([self.w_cls, self.w_bcls],
                                      [self.b_cls, self.b_bcls])

    def net(self, x):
        # TODO(synk): identity stand-in for the injected backbone `net`.
        return x

    def forward(self, x):
        x = self.net(x)
        w, b, offs, tn = self._cls
        (off, c), = offs
        return _apply_head_jit(x, w, b, tn, ((off, c),))[0]

    def b_forward(self, x):
        x = self.net(x)
        w, b, offs, tn = self._bcls
        (off, c), = offs
        return _apply_head_jit(x, w, b, tn, ((off, c),))[0]

    def c_forward(self, x):
        # Both heads in ONE pallas_call (one matmul, one x DMA); lane-aligned slices.
        x = self.net(x)
        w, b, offs, tn = self._fused
        return _apply_head_jit(x, w, b, tn, offs)


# ----------------------------------- test ------------------------------------

if __name__ == "__main__":
    key = jax.random.PRNGKey(0)

    def check(num_classes, batch, feature_dim):
        k_model, k_x = jax.random.split(jax.random.fold_in(key, num_classes))
        model = MutiClassifierPallas(k_model, num_classes=num_classes,
                                     feature_dim=feature_dim)
        # Features as produced by the backbone: (B, feature_dim).
        # NOTE: arithmetic intensity == B for this kernel; real callers should
        # batch as many rows as possible per call.
        x = jax.random.normal(k_x, (batch, feature_dim), jnp.float32)

        out1 = jax.block_until_ready(model.forward(x))
        out_b = jax.block_until_ready(model.b_forward(x))
        out2a, out2b = model.c_forward(x)
        out2a = jax.block_until_ready(out2a)
        out2b = jax.block_until_ready(out2b)

        ref1 = x @ model.w_cls.T + model.b_cls
        ref2 = x @ model.w_bcls.T + model.b_bcls
        assert out1.shape == (batch, num_classes)
        assert out_b.shape == (batch, num_classes * 2)
        assert out2a.shape == (batch, num_classes)
        assert out2b.shape == (batch, num_classes * 2)
        # MXU operands are bf16 (f32 accumulate) -> loose tolerance vs f32 ref.
        assert jnp.allclose(out1, ref1, atol=1e-2, rtol=1e-2)
        assert jnp.allclose(out_b, ref2, atol=1e-2, rtol=1e-2)
        assert jnp.allclose(out2a, ref1, atol=1e-2, rtol=1e-2)
        assert jnp.allclose(out2b, ref2, atol=1e-2, rtol=1e-2)
        # Fused path matches the single-head paths (same per-column math).
        assert jnp.allclose(out2a, out1, atol=1e-6)
        assert jnp.allclose(out2b, out_b, atol=1e-6)

    # Small head (single grid step) and a larger head that exercises the
    # multi-step grid + lane-aligned per-head split of the fused slab.
    check(num_classes=16, batch=16, feature_dim=512)
    check(num_classes=600, batch=16, feature_dim=512)

    print("KERNEL_OK")
</pallas_src>

<mosaic_0001>
module attributes {stable_mosaic.version = 11 : i64} {
  func.func @_fused_linear_kernel(%arg0: i32, %arg1: memref<16x512xbf16, #tpu.memory_space<vmem>>, %arg2: memref<512x128xbf16, #tpu.memory_space<vmem>>, %arg3: memref<1x128xf32, #tpu.memory_space<vmem>>, %arg4: memref<16x128xf32, #tpu.memory_space<vmem>>) attributes {dimension_semantics = [#tpu.dimension_semantics<parallel>], iteration_bounds = array<i64: 1>, scalar_prefetch = 0 : i64, scratch_operands = 0 : i64, tpu.core_type = #tpu.core_type<tc>, window_params = [{pipeline_mode = #tpu.pipeline_mode<synchronous>, transform_indices = @transform_0, window_bounds = array<i64: 16, 512>}, {transform_indices = @transform_1, window_bounds = array<i64: 512, 128>}, {transform_indices = @transform_2, window_bounds = array<i64: 1, 128>}, {transform_indices = @transform_3, window_bounds = array<i64: 16, 128>}]} {
    %c0 = arith.constant 0 : index
    %c0_0 = arith.constant 0 : index
    %0 = vector.load %arg1[%c0, %c0_0] : memref<16x512xbf16, #tpu.memory_space<vmem>>, vector<16x512xbf16>
    %c0_1 = arith.constant 0 : index
    %c0_2 = arith.constant 0 : index
    %1 = vector.load %arg2[%c0_1, %c0_2] : memref<512x128xbf16, #tpu.memory_space<vmem>>, vector<512x128xbf16>
    %cst = arith.constant dense<0.000000e+00> : vector<16x128xf32>
    %2 = tpu.matmul %0, %1, %cst {dimension_numbers = #tpu.dot_dimension_numbers<[1], [0], [0], [1], [0, 0, 1, 1], [], []>} : vector<16x512xbf16>, vector<512x128xbf16>, vector<16x128xf32> -> vector<16x128xf32>
    %c0_3 = arith.constant 0 : index
    %c0_4 = arith.constant 0 : index
    %3 = vector.load %arg3[%c0_3, %c0_4] : memref<1x128xf32, #tpu.memory_space<vmem>>, vector<1x128xf32>
    %4 = vector.broadcast %3 : vector<1x128xf32> to vector<16x128xf32>
    %5 = arith.addf %2, %4 : vector<16x128xf32>
    %c0_5 = arith.constant 0 : index
    %c0_6 = arith.constant 0 : index
    %6 = vector.load %arg4[%c0_5, %c0_6] : memref<16x128xf32, #tpu.memory_space<vmem>>, vector<16x128xf32>
    tpu.vector_store %arg4[%c0_5, %c0_6], %5 {strides = array<i32>} : memref<16x128xf32, #tpu.memory_space<vmem>>, vector<16x128xf32>,
    return
  }
  func.func @transform_0(%arg0: i32) -> (i32, i32) {
    %c0_i32 = arith.constant 0 : i32
    %c0_i32_0 = arith.constant 0 : i32
    %c0_i32_1 = arith.constant 0 : i32
    return %c0_i32, %c0_i32_0 : i32, i32
  }
  func.func @transform_1(%arg0: i32) -> (i32, i32) {
    %c0_i32 = arith.constant 0 : i32
    %c0_i32_0 = arith.constant 0 : i32
    return %c0_i32, %arg0 : i32, i32
  }
  func.func @transform_2(%arg0: i32) -> (i32, i32) {
    %c0_i32 = arith.constant 0 : i32
    %c0_i32_0 = arith.constant 0 : i32
    return %c0_i32, %arg0 : i32, i32
  }
  func.func @transform_3(%arg0: i32) -> (i32, i32) {
    %c0_i32 = arith.constant 0 : i32
    %c0_i32_0 = arith.constant 0 : i32
    return %c0_i32, %arg0 : i32, i32
  }
}

</mosaic_0001>

<llo_original>
// kernel: _apply_head.1
$region0: #{_apply_head.1}
  #allocation0 [shape = 'u32[]', space=smem, size = 0x4, offset = 0x4, fixed_abs, tag = 'smem constant byte address 0x4 - core index']
  #allocation1 [shape = 'u32[144,128]{1,0:T(1,128)}', space=vmem, size = 0x12000, scoped, tag = 'internal scratch']
  %s0 = inlined_call_operand.vmem [shape: bf16[16,512], index: 0, kind: input, shape index: {}]
  %s1 = inlined_call_operand.hbm [shape: bf16[512,128], index: 1, kind: input, shape index: {}]
  %s2 = inlined_call_operand.vmem [shape: f32[1,128], index: 2, kind: input, shape index: {}]
  %s3 = inlined_call_operand.hbm [shape: f32[16,128], index: 3, kind: output, shape index: {}]
  %s4 = sld [smem:[#allocation0]]
  $region26: #{_apply_head.1} parent=0
    _
  %s6 = ssub.s32 1, %s4
  %s7 = scalar_select 0, %s6, %s4
  $region1: #{_apply_head.1} parent=0
    #allocation2 [shape = 'u8[131072]{0}', space=vmem, size = 0x20000, scoped, tag = 'input window, operand 1, single buffered']
    #allocation3 [shape = 's32[1]{0}', space=sflag, size = 0x4, scoped, tag = 'scoped memory for _apply_head.1']
    #allocation4 [shape = 's32[1]{0}', space=sflag, size = 0x4, scoped, tag = 'scoped memory for _apply_head.1']
    #allocation5 [shape = 'u8[8192]{0}', space=vmem, size = 0x2000, scoped, tag = 'output window, operand 0, single buffered']
    %8 = vsyncpa [#allocation3], 0
    %9 = vsyncpa [#allocation4], 0
    // Predicated region
    $region2: #{_apply_head.1} parent=1 // pred_check
      _
    $region3: #{_apply_head.1} parent=1 // pred_check_branch
      %11 = sbr.rel (0) target = $region5
    $region4: #{_apply_head.1} parent=1 // pred_region
      _
    $region5: #{_apply_head.1} parent=1 // pred_fallthru
      _
    // Predicated region
    $region6: #{_apply_head.1} parent=1 // pred_check
      _
    $region7: #{_apply_head.1} parent=1 // pred_check_branch
      %13 = sbr.rel (0) target = $region9
    $region8: #{_apply_head.1} parent=1 // pred_region
      %s15 = ssub.s32 4096, 4096
      %16 = vsyncadd [#allocation3], %s15
      %s17 = sshll.u32 [#allocation2], 4
      %s18 = int_to_ptr.vmem [resolvable:$true] %s17
      %23 = dma.hbm_to_vmem [thread:$0]  %s1, 4096, %s18, [#allocation3], 64, 64, 4
    $region9: #{_apply_head.1} parent=1 // pred_fallthru
      _
    // Predicated region
    $region10: #{_apply_head.1} parent=1 // pred_check
      _
    $region11: #{_apply_head.1} parent=1 // pred_check_branch
      %25 = sbr.rel (0) target = $region13
    $region12: #{_apply_head.1} parent=1 // pred_region
      _
    $region13: #{_apply_head.1} parent=1 // pred_fallthru
      _
    // Predicated region
    $region14: #{_apply_head.1} parent=1 // pred_check
      _
    $region15: #{_apply_head.1} parent=1 // pred_check_branch
      %27 = sbr.rel (0) target = $region17
    $region16: #{_apply_head.1} parent=1 // pred_region
      %28 = dma.done [#allocation3], 4096
    $region17: #{_apply_head.1} parent=1 // pred_fallthru
      _
    %v30 = vld [vmem:[%s0] sm:$0xff]
    %v31 = vld [vmem:[%s0 + $0x8] sm:$0xff]
    %v32 = vld [vmem:[%s0 + $0x10] sm:$0xff]
    %v33 = vld [vmem:[%s0 + $0x18] sm:$0xff]
    %v34 = vld [vmem:[#allocation2] sm:$0xf]
    %v35 = vld [vmem:[#allocation2 + $0x4] sm:$0xf]
    %v36 = vld [vmem:[#allocation2 + $0x8] sm:$0xf]
    %v37 = vld [vmem:[#allocation2 + $0xc] sm:$0xf]
    %v38 = vld [vmem:[#allocation2 + $0x10] sm:$0xf]
    %v39 = vld [vmem:[#allocation2 + $0x14] sm:$0xf]
    %v40 = vld [vmem:[#allocation2 + $0x18] sm:$0xf]
    %v41 = vld [vmem:[#allocation2 + $0x1c] sm:$0xf]
    %v42 = vld [vmem:[#allocation2 + $0x20] sm:$0xf]
    %v43 = vld [vmem:[#allocation2 + $0x24] sm:$0xf]
    %v44 = vld [vmem:[#allocation2 + $0x28] sm:$0xf]
    %v45 = vld [vmem:[#allocation2 + $0x2c] sm:$0xf]
    %v46 = vld [vmem:[#allocation2 + $0x30] sm:$0xf]
    %v47 = vld [vmem:[#allocation2 + $0x34] sm:$0xf]
    %v48 = vld [vmem:[#allocation2 + $0x38] sm:$0xf]
    %v49 = vld [vmem:[#allocation2 + $0x3c] sm:$0xf]
    %v50 = vld [vmem:[#allocation2 + $0x40] sm:$0xf]
    %v51 = vld [vmem:[#allocation2 + $0x44] sm:$0xf]
    %v52 = vld [vmem:[#allocation2 + $0x48] sm:$0xf]
    %v53 = vld [vmem:[#allocation2 + $0x4c] sm:$0xf]
    %v54 = vld [vmem:[#allocation2 + $0x50] sm:$0xf]
    %v55 = vld [vmem:[#allocation2 + $0x54] sm:$0xf]
    %v56 = vld [vmem:[#allocation2 + $0x58] sm:$0xf]
    %v57 = vld [vmem:[#allocation2 + $0x5c] sm:$0xf]
    %v58 = vld [vmem:[#allocation2 + $0x60] sm:$0xf]
    %v59 = vld [vmem:[#allocation2 + $0x64] sm:$0xf]
    %v60 = vld [vmem:[#allocation2 + $0x68] sm:$0xf]
    %v61 = vld [vmem:[#allocation2 + $0x6c] sm:$0xf]
    %v62 = vld [vmem:[#allocation2 + $0x70] sm:$0xf]
    %v63 = vld [vmem:[#allocation2 + $0x74] sm:$0xf]
    %v64 = vld [vmem:[#allocation2 + $0x78] sm:$0xf]
    %v65 = vld [vmem:[#allocation2 + $0x7c] sm:$0xf]
    %v66 = vld [vmem:[#allocation2 + $0x80] sm:$0xf]
    %v67 = vld [vmem:[#allocation2 + $0x84] sm:$0xf]
    %v68 = vld [vmem:[#allocation2 + $0x88] sm:$0xf]
    %v69 = vld [vmem:[#allocation2 + $0x8c] sm:$0xf]
    %v70 = vld [vmem:[#allocation2 + $0x90] sm:$0xf]
    %v71 = vld [vmem:[#allocation2 + $0x94] sm:$0xf]
    %v72 = vld [vmem:[#allocation2 + $0x98] sm:$0xf]
    %v73 = vld [vmem:[#allocation2 + $0x9c] sm:$0xf]
    %v74 = vld [vmem:[#allocation2 + $0xa0] sm:$0xf]
    %v75 = vld [vmem:[#allocation2 + $0xa4] sm:$0xf]
    %v76 = vld [vmem:[#allocation2 + $0xa8] sm:$0xf]
    %v77 = vld [vmem:[#allocation2 + $0xac] sm:$0xf]
    %v78 = vld [vmem:[#allocation2 + $0xb0] sm:$0xf]
    %v79 = vld [vmem:[#allocation2 + $0xb4] sm:$0xf]
    %v80 = vld [vmem:[#allocation2 + $0xb8] sm:$0xf]
    %v81 = vld [vmem:[#allocation2 + $0xbc] sm:$0xf]
    %v82 = vld [vmem:[#allocation2 + $0xc0] sm:$0xf]
    %v83 = vld [vmem:[#allocation2 + $0xc4] sm:$0xf]
    %v84 = vld [vmem:[#allocation2 + $0xc8] sm:$0xf]
    %v85 = vld [vmem:[#allocation2 + $0xcc] sm:$0xf]
    %v86 = vld [vmem:[#allocation2 + $0xd0] sm:$0xf]
    %v87 = vld [vmem:[#allocation2 + $0xd4] sm:$0xf]
    %v88 = vld [vmem:[#allocation2 + $0xd8] sm:$0xf]
    %v89 = vld [vmem:[#allocation2 + $0xdc] sm:$0xf]
    %v90 = vld [vmem:[#allocation2 + $0xe0] sm:$0xf]
    %v91 = vld [vmem:[#allocation2 + $0xe4] sm:$0xf]
    %v92 = vld [vmem:[#allocation2 + $0xe8] sm:$0xf]
    %v93 = vld [vmem:[#allocation2 + $0xec] sm:$0xf]
    %v94 = vld [vmem:[#allocation2 + $0xf0] sm:$0xf]
    %v95 = vld [vmem:[#allocation2 + $0xf4] sm:$0xf]
    %v96 = vld [vmem:[#allocation2 + $0xf8] sm:$0xf]
    %v97 = vld [vmem:[#allocation2 + $0xfc] sm:$0xf]
    %v98 = vld [vmem:[%s2] sm:$0x1]
    %v100 = vlaneseq
    %v101 = vshrl.u32 %v100, 7
    %v102 = vsub.s32 0, %v101
    %v103 = vrot.slane %v98, %v102
    %v109 = vunpack.c.l.b16 %v30
    %v110 = vunpack.c.h.b16 %v30
    %v111 = vunpack.c.l.b16 %v31
    %v112 = vunpack.c.h.b16 %v31
    %v113 = vunpack.c.l.b16 %v32
    %v114 = vunpack.c.h.b16 %v32
    %v115 = vunpack.c.l.b16 %v33
    %v116 = vunpack.c.h.b16 %v33
    %v117 = vpack.c.b16 %v113, %v109
    %v118 = vpack.c.b16 %v114, %v110
    %v119 = vpack.c.b16 %v115, %v111
    %v120 = vpack.c.b16 %v116, %v112
    %v189 = vunpack.c.l.b16 %v34
    %v190 = vunpack.c.l.b16 %v35
    %v191 = vunpack.c.l.b16 %v36
    %v192 = vunpack.c.l.b16 %v37
    %v193 = vunpack.c.l.b16 %v38
    %v194 = vunpack.c.l.b16 %v39
    %v195 = vunpack.c.l.b16 %v40
    %v196 = vunpack.c.l.b16 %v41
    %v197 = vunpack.c.l.b16 %v42
    %v198 = vunpack.c.l.b16 %v43
    %v199 = vunpack.c.l.b16 %v44
    %v200 = vunpack.c.l.b16 %v45
    %v201 = vunpack.c.l.b16 %v46
    %v202 = vunpack.c.l.b16 %v47
    %v203 = vunpack.c.l.b16 %v48
    %v204 = vunpack.c.l.b16 %v49
    %v205 = vunpack.c.l.b16 %v50
    %v206 = vunpack.c.l.b16 %v51
    %v207 = vunpack.c.l.b16 %v52
    %v208 = vunpack.c.l.b16 %v53
    %v209 = vunpack.c.l.b16 %v54
    %v210 = vunpack.c.l.b16 %v55
    %v211 = vunpack.c.l.b16 %v56
    %v212 = vunpack.c.l.b16 %v57
    %v213 = vunpack.c.l.b16 %v58
    %v214 = vunpack.c.l.b16 %v59
    %v215 = vunpack.c.l.b16 %v60
    %v216 = vunpack.c.l.b16 %v61
    %v217 = vunpack.c.l.b16 %v62
    %v218 = vunpack.c.l.b16 %v63
    %v219 = vunpack.c.l.b16 %v64
    %v220 = vunpack.c.l.b16 %v65
    %v221 = vunpack.c.l.b16 %v66
    %v222 = vunpack.c.l.b16 %v67
    %v223 = vunpack.c.l.b16 %v68
    %v224 = vunpack.c.l.b16 %v69
    %v225 = vunpack.c.l.b16 %v70
    %v226 = vunpack.c.l.b16 %v71
    %v227 = vunpack.c.l.b16 %v72
    %v228 = vunpack.c.l.b16 %v73
    %v229 = vunpack.c.l.b16 %v74
    %v230 = vunpack.c.l.b16 %v75
    %v231 = vunpack.c.l.b16 %v76
    %v232 = vunpack.c.l.b16 %v77
    %v233 = vunpack.c.l.b16 %v78
    %v234 = vunpack.c.l.b16 %v79
    %v235 = vunpack.c.l.b16 %v80
    %v236 = vunpack.c.l.b16 %v81
    %v237 = vunpack.c.l.b16 %v82
    %v238 = vunpack.c.l.b16 %v83
    %v239 = vunpack.c.l.b16 %v84
    %v240 = vunpack.c.l.b16 %v85
    %v241 = vunpack.c.l.b16 %v86
    %v242 = vunpack.c.l.b16 %v87
    %v243 = vunpack.c.l.b16 %v88
    %v244 = vunpack.c.l.b16 %v89
    %v245 = vunpack.c.l.b16 %v90
    %v246 = vunpack.c.l.b16 %v91
    %v247 = vunpack.c.l.b16 %v92
    %v248 = vunpack.c.l.b16 %v93
    %v249 = vunpack.c.l.b16 %v94
    %v250 = vunpack.c.l.b16 %v95
    %v251 = vunpack.c.l.b16 %v96
    %v252 = vunpack.c.l.b16 %v97
    %v253 = vpack.c.b16 %v190, %v189
    %v254 = vpack.c.b16 %v192, %v191
    %v255 = vpack.c.b16 %v194, %v193
    %v256 = vpack.c.b16 %v196, %v195
    %v257 = vpack.c.b16 %v198, %v197
    %v258 = vpack.c.b16 %v200, %v199
    %v259 = vpack.c.b16 %v202, %v201
    %v260 = vpack.c.b16 %v204, %v203
    %v261 = vpack.c.b16 %v206, %v205
    %v262 = vpack.c.b16 %v208, %v207
    %v263 = vpack.c.b16 %v210, %v209
    %v264 = vpack.c.b16 %v212, %v211
    %v265 = vpack.c.b16 %v214, %v213
    %v266 = vpack.c.b16 %v216, %v215
    %v267 = vpack.c.b16 %v218, %v217
    %v268 = vpack.c.b16 %v220, %v219
    %v269 = vpack.c.b16 %v222, %v221
    %v270 = vpack.c.b16 %v224, %v223
    %v271 = vpack.c.b16 %v226, %v225
    %v272 = vpack.c.b16 %v228, %v227
    %v273 = vpack.c.b16 %v230, %v229
    %v274 = vpack.c.b16 %v232, %v231
    %v275 = vpack.c.b16 %v234, %v233
    %v276 = vpack.c.b16 %v236, %v235
    %v277 = vpack.c.b16 %v238, %v237
    %v278 = vpack.c.b16 %v240, %v239
    %v279 = vpack.c.b16 %v242, %v241
    %v280 = vpack.c.b16 %v244, %v243
    %v281 = vpack.c.b16 %v246, %v245
    %v282 = vpack.c.b16 %v248, %v247
    %v283 = vpack.c.b16 %v250, %v249
    %v284 = vpack.c.b16 %v252, %v251
    %317 = vmatprep.subr.bf16.mxu0 0
    %318 = vmatpush1.bf16.msra.mxu0 %v253
    %319 = vmatprep.subr.bf16.mxu0 0
    %320 = vmatpush1.bf16.msra.mxu0 %v254
    %321 = vmatprep.subr.bf16.mxu0 0
    %322 = vmatpush1.bf16.msra.mxu0 %v255
    %323 = vmatprep.subr.bf16.mxu0 0
    %324 = vmatpush1.bf16.msra.mxu0 %v256
    %325 = vmatprep.subr.bf16.mxu0 0
    %326 = vmatpush1.bf16.msra.mxu0 %v257
    %327 = vmatprep.subr.bf16.mxu0 0
    %328 = vmatpush1.bf16.msra.mxu0 %v258
    %329 = vmatprep.subr.bf16.mxu0 0
    %330 = vmatpush1.bf16.msra.mxu0 %v259
    %331 = vmatprep.subr.bf16.mxu0 0
    %332 = vmatpush1.bf16.msra.mxu0 %v260
    %333 = vmatprep.subr.bf16.mxu0 0
    %334 = vmatpush1.bf16.msra.mxu0 %v261
    %335 = vmatprep.subr.bf16.mxu0 0
    %336 = vmatpush1.bf16.msra.mxu0 %v262
    %337 = vmatprep.subr.bf16.mxu0 0
    %338 = vmatpush1.bf16.msra.mxu0 %v263
    %339 = vmatprep.subr.bf16.mxu0 0
    %340 = vmatpush1.bf16.msra.mxu0 %v264
    %341 = vmatprep.subr.bf16.mxu0 0
    %342 = vmatpush1.bf16.msra.mxu0 %v265
    %343 = vmatprep.subr.bf16.mxu0 0
    %344 = vmatpush1.bf16.msra.mxu0 %v266
    %345 = vmatprep.subr.bf16.mxu0 0
    %346 = vmatpush1.bf16.msra.mxu0 %v267
    %347 = vmatprep.subr.bf16.mxu0 0
    %348 = vmatpush1.bf16.msra.mxu0 %v268
    %349 = vmatprep.mubr.bf16.mxu0 %v118
    %350 = vmatmul.mubr.bf16.gmra.mrb[0].mxu0 %v117
    %v351 = vpop.f32.mrb[0].mxu0
    %v352 = vadd.f32 %v103, %v351
    %v353 = vpop.f32.mrb[0].mxu0
    %v354 = vpop.f32.mrb[0].mxu0
    %v355 = vadd.f32 %v103, %v354
    %v356 = vpop.f32.mrb[0].mxu0
    %357 = vdwg.mxu0
    %358 = vmatprep.subr.bf16.mxu0 0
    %359 = vmatpush1.bf16.msra.mxu0 %v269
    %360 = vmatprep.subr.bf16.mxu0 0
    %361 = vmatpush1.bf16.msra.mxu0 %v270
    %362 = vmatprep.subr.bf16.mxu0 0
    %363 = vmatpush1.bf16.msra.mxu0 %v271
    %364 = vmatprep.subr.bf16.mxu0 0
    %365 = vmatpush1.bf16.msra.mxu0 %v272
    %366 = vmatprep.subr.bf16.mxu0 0
    %367 = vmatpush1.bf16.msra.mxu0 %v273
    %368 = vmatprep.subr.bf16.mxu0 0
    %369 = vmatpush1.bf16.msra.mxu0 %v274
    %370 = vmatprep.subr.bf16.mxu0 0
    %371 = vmatpush1.bf16.msra.mxu0 %v275
    %372 = vmatprep.subr.bf16.mxu0 0
    %373 = vmatpush1.bf16.msra.mxu0 %v276
    %374 = vmatprep.subr.bf16.mxu0 0
    %375 = vmatpush1.bf16.msra.mxu0 %v277
    %376 = vmatprep.subr.bf16.mxu0 0
    %377 = vmatpush1.bf16.msra.mxu0 %v278
    %378 = vmatprep.subr.bf16.mxu0 0
    %379 = vmatpush1.bf16.msra.mxu0 %v279
    %380 = vmatprep.subr.bf16.mxu0 0
    %381 = vmatpush1.bf16.msra.mxu0 %v280
    %382 = vmatprep.subr.bf16.mxu0 0
    %383 = vmatpush1.bf16.msra.mxu0 %v281
    %384 = vmatprep.subr.bf16.mxu0 0
    %385 = vmatpush1.bf16.msra.mxu0 %v282
    %386 = vmatprep.subr.bf16.mxu0 0
    %387 = vmatpush1.bf16.msra.mxu0 %v283
    %388 = vmatprep.subr.bf16.mxu0 0
    %389 = vmatpush1.bf16.msra.mxu0 %v284
    %390 = vmatprep.mubr.bf16.mxu0 %v120
    %391 = vmatmul.mubr.bf16.gmra.mrb[0].mxu0 %v119
    %v392 = vpop.f32.mrb[0].mxu0
    %v393 = vadd.f32 %v352, %v392
    %v394 = vpop.f32.mrb[0].mxu0
    %v395 = vpop.f32.mrb[0].mxu0
    %v396 = vadd.f32 %v355, %v395
    %v397 = vpop.f32.mrb[0].mxu0
    %398 = vdwg.mxu0
    %399 = vst [vmem:[#allocation5] sm:$0xff] %v393
    %400 = vst [vmem:[#allocation5 + $0x8] sm:$0xff] %v396
    // Predicated region
    $region18: #{_apply_head.1} parent=1 // pred_check
      _
    $region19: #{_apply_head.1} parent=1 // pred_check_branch
      %402 = sbr.rel (0) target = $region21
    $region20: #{_apply_head.1} parent=1 // pred_region
      %s404 = ssub.s32 256, 256
      %405 = vsyncadd [#allocation4], %s404
      %s406 = sshll.u32 [#allocation5], 4
      %s407 = int_to_ptr.vmem [resolvable:$true] %s406
      %412 = dma.vmem_to_hbm [thread:$0]  %s407, 256, %s3, [#allocation4], 128, 128, 8
    $region21: #{_apply_head.1} parent=1 // pred_fallthru
      _
    // Predicated region
    $region22: #{_apply_head.1} parent=1 // pred_check
      _
    $region23: #{_apply_head.1} parent=1 // pred_check_branch
      %414 = sbr.rel (0) target = $region25
    $region24: #{_apply_head.1} parent=1 // pred_region
      %415 = dma.done [#allocation4], 256
    $region25: #{_apply_head.1} parent=1 // pred_fallthru
      _
    %416 = vsyncpa [#allocation3], 1
    %417 = vsyncpa [#allocation4], 1

</llo_original>
